<compile_context>
chip_gen: v5e
topology: v5e:2x2
jax: 0.10.0
libtpu: 0.0.40
codegen_flags: <defaults>
</compile_context>

<pallas_src>
import functools

import jax
import jax.numpy as jnp
from jax.experimental import pallas as pl
from jax.experimental.pallas import tpu as pltpu

ALPHA = 1.0
GAMMA = 2.0

_MAX_TILE_ROWS = 4096
_NUM_F32_TEMPS = 4          # x_f32, z, exp(z), select output (live [TM,C] f32 temps)
_NUM_CORES = 2              # v7x has 2 TensorCores/chip; serial (harmless) elsewhere


def _vmem_budget_and_limit():
    """(working-set byte budget for one tile, vmem_limit_bytes) -- generation aware."""
    cap = 64 << 20  # assume the smallest (v7x) if we cannot query
    try:
        info = pltpu.get_tpu_info()
        cap = int(getattr(info, "vmem_capacity_bytes", cap)) or cap
    except Exception:
        pass
    limit = int(min(cap // 2, 64 << 20))          # scoped VMEM for this kernel
    budget = max(8 << 20, limit - (12 << 20))     # leave pipelining/compiler headroom
    return budget, limit


def _choose_tile_rows(n, c, itemsize, max_rows_per_tile, budget):
    packing = max(8, 32 // itemsize)              # sublane packing: 8 f32, 16 bf16, 32 int8
    c_pad = ((c + 127) // 128) * 128              # lane padding of the class axis
    # per-row bytes: 2x native input + col-iota scratch + f32 temps + 2x padded targets
    bytes_per_row = c_pad * (2 * itemsize + 4 + 4 * _NUM_F32_TEMPS) + 2 * 128 * 4
    tm = budget // bytes_per_row
    tm = max(packing, min(_MAX_TILE_ROWS, (tm // packing) * packing))
    if max_rows_per_tile is not None:
        tm = min(tm, max(packing, (max_rows_per_tile // packing) * packing))
    if n <= tm:
        return n  # single full-batch tile; full-dim block is always legal
    return tm


def _focal_loss_kernel(logits_ref, targets_ref, out_ref, col_ref, *, tm, c, n, inner_tiles):
    core = pl.program_id(0)
    i = pl.program_id(1)

    @pl.when(i == 0)
    def _():
        out_ref[...] = jnp.zeros_like(out_ref)
        col_ref[...] = jax.lax.broadcasted_iota(jnp.int32, (tm, c), 1)

    x = logits_ref[...].astype(jnp.float32)                       # [TM, C] f32 (in-register upcast)
    t = targets_ref[...]                                          # [TM, 1] int32

    # numerically-stable log-softmax pieces
    m = jnp.max(x, axis=-1, keepdims=True)                        # [TM, 1]
    z = x - m                                                     # [TM, C]
    lse = jnp.log(jnp.sum(jnp.exp(z), axis=-1, keepdims=True))    # [TM, 1]

    # target logit via compare+select (no materialized one-hot multiply, no MXU)
    tgt = jnp.sum(jnp.where(col_ref[...] == t, z, 0.0), axis=-1, keepdims=True)

    ce = lse - tgt                                                # [TM, 1]
    pt = jnp.exp(-ce)
    w = 1.0 - pt
    if GAMMA == 2.0:
        fw = w * w               # explicit square: keep pow (log+exp) off the EUP
    elif GAMMA == 1.0:
        fw = w
    else:
        fw = w ** GAMMA
    f = ALPHA * fw * ce                                           # [TM, 1]

    # mask rows of a padded / out-of-range tile so the mean divides by the true N
    # (select, not multiply-by-mask, so NaN/Inf in block padding cannot leak)
    row0 = (core * inner_tiles + i) * tm
    row = row0 + jax.lax.broadcasted_iota(jnp.int32, (tm, 1), 0)
    f = jnp.where(row < n, f, 0.0)

    # accumulate this core's partial sum into its resident output block
    out_ref[...] += jnp.sum(f)


def focal_loss(logits, targets, *, max_rows_per_tile=None):
    """logits: [N, C] (any float dtype), targets: [N] int -> scalar f32 mean focal loss."""
    n, c = logits.shape
    itemsize = jnp.dtype(logits.dtype).itemsize
    budget, vmem_limit = _vmem_budget_and_limit()
    tm = _choose_tile_rows(n, c, itemsize, max_rows_per_tile, budget)

    n_tiles = pl.cdiv(n, tm)
    inner = pl.cdiv(n_tiles, _NUM_CORES)

    def in_map(core, i):
        blk = core * inner + i
        # clamp so a (masked-out) excess block still DMAs in-bounds data
        return (jnp.minimum(blk, n_tiles - 1), 0)

    targets_2d = targets.astype(jnp.int32).reshape(n, 1)
    kernel = functools.partial(_focal_loss_kernel, tm=tm, c=c, n=n, inner_tiles=inner)

    # TODO(synk): for vocab-scale C, tile the class axis too with an online
    # logsumexp; here a full-C block per tile is kept (fine for classifier-sized C).
    out = pl.pallas_call(
        kernel,
        out_shape=jax.ShapeDtypeStruct((_NUM_CORES * 8, 128), jnp.float32),
        grid_spec=pltpu.PrefetchScalarGridSpec(
            num_scalar_prefetch=0,
            grid=(_NUM_CORES, inner),
            in_specs=[
                pl.BlockSpec((tm, c), in_map),   # logits tile (native dtype)
                pl.BlockSpec((tm, 1), in_map),   # target indices tile
            ],
            out_specs=pl.BlockSpec((8, 128), lambda core, i: (core, 0)),
            scratch_shapes=[pltpu.VMEM((tm, c), jnp.int32)],   # hoisted column iota
        ),
        compiler_params=pltpu.CompilerParams(
            dimension_semantics=("parallel", "arbitrary"),
            vmem_limit_bytes=vmem_limit,
        ),
        cost_estimate=pl.CostEstimate(
            flops=7 * n * c,
            transcendentals=n * c + 3 * n,
            bytes_accessed=n * c * itemsize + n * 4 + _NUM_CORES * 8 * 128 * 4,
        ),
    )(logits, targets_2d)

    partials = out.reshape(_NUM_CORES, 8, 128)[:, 0, 0]
    return jnp.sum(partials) / n


def _focal_loss_ref(logits, targets):
    # pure-JAX reference matching the PyTorch module (reduce=True)
    logp = jax.nn.log_softmax(logits.astype(jnp.float32), axis=-1)
    ce = -jnp.take_along_axis(logp, targets[:, None].astype(jnp.int32), axis=-1)[:, 0]
    pt = jnp.exp(-ce)
    return jnp.mean(ALPHA * (1.0 - pt) ** GAMMA * ce)


if __name__ == "__main__":
    key = jax.random.PRNGKey(0)
    k1, k2, k3, k4 = jax.random.split(key, 4)

    # small case matching the module's [N, C] logits / [N] class-index targets
    N, C = 8, 32
    logits = jax.random.normal(k1, (N, C), dtype=jnp.float32)
    targets = jax.random.randint(k2, (N,), 0, C, dtype=jnp.int32)
    loss = focal_loss(logits, targets)
    jax.block_until_ready(loss)
    ref = _focal_loss_ref(logits, targets)
    assert jnp.allclose(loss, ref, atol=1e-5, rtol=1e-5), (loss, ref)

    # bf16 case with forced small tiles: exercises native-dtype input, the
    # multi-tile / two-core accumulator pipeline and masking of partial tiles.
    N2, C2 = 300, 160
    logits2 = jax.random.normal(k3, (N2, C2), dtype=jnp.bfloat16)
    targets2 = jax.random.randint(k4, (N2,), 0, C2, dtype=jnp.int32)
    loss2 = focal_loss(logits2, targets2, max_rows_per_tile=64)
    jax.block_until_ready(loss2)
    ref2 = _focal_loss_ref(logits2, targets2)
    assert jnp.allclose(loss2, ref2, atol=1e-4, rtol=1e-4), (loss2, ref2)

    print("KERNEL_OK")
</pallas_src>

<mosaic_0001>
module attributes {stable_mosaic.version = 11 : i64} {
  func.func @_focal_loss_kernel(%arg0: i32, %arg1: i32, %arg2: memref<8x32xf32, #tpu.memory_space<vmem>>, %arg3: memref<8x1xi32, #tpu.memory_space<vmem>>, %arg4: memref<8x128xf32, #tpu.memory_space<vmem>>, %arg5: memref<8x32xi32, #tpu.memory_space<vmem>>) attributes {dimension_semantics = [#tpu.dimension_semantics<parallel>, #tpu.dimension_semantics<arbitrary>], iteration_bounds = array<i64: 2, 1>, scalar_prefetch = 0 : i64, scratch_operands = 1 : i64, tpu.core_type = #tpu.core_type<tc>, window_params = [{transform_indices = @transform_0, window_bounds = array<i64: 8, 32>}, {transform_indices = @transform_1, window_bounds = array<i64: 8, 1>}, {transform_indices = @transform_2, window_bounds = array<i64: 8, 128>}]} {
    %c0_i32 = arith.constant 0 : i32
    %0 = arith.cmpi eq, %arg1, %c0_i32 : i32
    %1 = arith.extui %0 : i1 to i32
    %c0_i32_0 = arith.constant 0 : i32
    %2 = arith.cmpi ne, %1, %c0_i32_0 : i32
    scf.if %2 {
      %cst_19 = arith.constant 0.000000e+00 : f32
      %48 = vector.broadcast %cst_19 : f32 to vector<8x128xf32>
      %c0_20 = arith.constant 0 : index
      %c0_21 = arith.constant 0 : index
      %49 = vector.load %arg4[%c0_20, %c0_21] : memref<8x128xf32, #tpu.memory_space<vmem>>, vector<8x128xf32>
      tpu.vector_store %arg4[%c0_20, %c0_21], %48 {strides = array<i32>} : memref<8x128xf32, #tpu.memory_space<vmem>>, vector<8x128xf32>,
      %50 = tpu.iota {dimensions = array<i32: 1>} : vector<8x32xi32>
      %c0_22 = arith.constant 0 : index
      %c0_23 = arith.constant 0 : index
      %51 = vector.load %arg5[%c0_22, %c0_23] : memref<8x32xi32, #tpu.memory_space<vmem>>, vector<8x32xi32>
      tpu.vector_store %arg5[%c0_22, %c0_23], %50 {strides = array<i32>} : memref<8x32xi32, #tpu.memory_space<vmem>>, vector<8x32xi32>,
    } else {
    }
    %c0 = arith.constant 0 : index
    %c0_1 = arith.constant 0 : index
    %3 = vector.load %arg2[%c0, %c0_1] : memref<8x32xf32, #tpu.memory_space<vmem>>, vector<8x32xf32>
    %c0_2 = arith.constant 0 : index
    %c0_3 = arith.constant 0 : index
    %4 = vector.load %arg3[%c0_2, %c0_3] : memref<8x1xi32, #tpu.memory_space<vmem>>, vector<8x1xi32>
    %cst = arith.constant dense<0xFF800000> : vector<8xf32>
    %5 = vector.multi_reduction <maximumf>, %3, %cst [1] : vector<8x32xf32> to vector<8xf32>
    %6 = vector.shape_cast %5 : vector<8xf32> to vector<8x1xf32>
    %7 = vector.broadcast %6 : vector<8x1xf32> to vector<8x32xf32>
    %8 = arith.subf %3, %7 : vector<8x32xf32>
    %9 = math.exp %8 : vector<8x32xf32>
    %cst_4 = arith.constant dense<0.000000e+00> : vector<8xf32>
    %10 = vector.multi_reduction <add>, %9, %cst_4 [1] : vector<8x32xf32> to vector<8xf32>
    %11 = vector.shape_cast %10 : vector<8xf32> to vector<8x1xf32>
    %12 = math.log %11 : vector<8x1xf32>
    %c0_5 = arith.constant 0 : index
    %c0_6 = arith.constant 0 : index
    %13 = vector.load %arg5[%c0_5, %c0_6] : memref<8x32xi32, #tpu.memory_space<vmem>>, vector<8x32xi32>
    %14 = vector.broadcast %4 : vector<8x1xi32> to vector<8x32xi32>
    %15 = arith.cmpi eq, %13, %14 : vector<8x32xi32>
    %cst_7 = arith.constant 0.000000e+00 : f32
    %16 = vector.broadcast %cst_7 : f32 to vector<8x32xf32>
    %17 = arith.select %15, %8, %16 : vector<8x32xi1>, vector<8x32xf32>
    %cst_8 = arith.constant dense<0.000000e+00> : vector<8xf32>
    %18 = vector.multi_reduction <add>, %17, %cst_8 [1] : vector<8x32xf32> to vector<8xf32>
    %19 = vector.shape_cast %18 : vector<8xf32> to vector<8x1xf32>
    %20 = arith.subf %12, %19 : vector<8x1xf32>
    %cst_9 = arith.constant 0.000000e+00 : f32
    %21 = vector.broadcast %cst_9 : f32 to vector<8x1xf32>
    %22 = arith.subf %21, %20 : vector<8x1xf32>
    %23 = math.exp %22 : vector<8x1xf32>
    %cst_10 = arith.constant 1.000000e+00 : f32
    %24 = vector.broadcast %cst_10 : f32 to vector<8x1xf32>
    %25 = arith.subf %24, %23 : vector<8x1xf32>
    %26 = arith.mulf %25, %25 : vector<8x1xf32>
    %cst_11 = arith.constant 1.000000e+00 : f32
    %27 = vector.broadcast %cst_11 : f32 to vector<8x1xf32>
    %28 = arith.mulf %27, %26 : vector<8x1xf32>
    %29 = arith.mulf %28, %20 : vector<8x1xf32>
    %c1_i32 = arith.constant 1 : i32
    %30 = arith.muli %arg0, %c1_i32 : i32
    %31 = arith.addi %30, %arg1 : i32
    %c8_i32 = arith.constant 8 : i32
    %32 = arith.muli %31, %c8_i32 : i32
    %33 = tpu.iota {dimensions = array<i32: 0>} : vector<8x1xi32>
    %34 = vector.broadcast %32 : i32 to vector<8x1xi32>
    %35 = arith.addi %34, %33 : vector<8x1xi32>
    %c8_i32_12 = arith.constant 8 : i32
    %36 = vector.broadcast %c8_i32_12 : i32 to vector<8x1xi32>
    %37 = arith.cmpi slt, %35, %36 : vector<8x1xi32>
    %cst_13 = arith.constant 0.000000e+00 : f32
    %38 = vector.broadcast %cst_13 : f32 to vector<8x1xf32>
    %39 = arith.select %37, %29, %38 : vector<8x1xi1>, vector<8x1xf32>
    %c0_14 = arith.constant 0 : index
    %c0_15 = arith.constant 0 : index
    %40 = vector.load %arg4[%c0_14, %c0_15] : memref<8x128xf32, #tpu.memory_space<vmem>>, vector<8x128xf32>
    %41 = vector.shape_cast %39 : vector<8x1xf32> to vector<1x8x1xf32>
    %cst_16 = arith.constant dense<0.000000e+00> : vector<1xf32>
    %42 = vector.multi_reduction <add>, %41, %cst_16 [1, 2] : vector<1x8x1xf32> to vector<1xf32>
    %43 = vector.shape_cast %42 : vector<1xf32> to vector<1x1x1xf32>
    %44 = vector.extract %43[0, 0, 0] : f32 from vector<1x1x1xf32>
    %45 = vector.broadcast %44 : f32 to vector<8x128xf32>
    %46 = arith.addf %40, %45 : vector<8x128xf32>
    %c0_17 = arith.constant 0 : index
    %c0_18 = arith.constant 0 : index
    %47 = vector.load %arg4[%c0_17, %c0_18] : memref<8x128xf32, #tpu.memory_space<vmem>>, vector<8x128xf32>
    tpu.vector_store %arg4[%c0_17, %c0_18], %46 {strides = array<i32>} : memref<8x128xf32, #tpu.memory_space<vmem>>, vector<8x128xf32>,
    return
  }
  func.func @transform_0(%arg0: i32, %arg1: i32) -> (i32, i32) {
    %c1_i32 = arith.constant 1 : i32
    %0 = arith.muli %arg0, %c1_i32 : i32
    %1 = arith.addi %0, %arg1 : i32
    %c0_i32 = arith.constant 0 : i32
    %2 = arith.minsi %1, %c0_i32 : i32
    %c0_i32_0 = arith.constant 0 : i32
    %c0_i32_1 = arith.constant 0 : i32
    return %2, %c0_i32_0 : i32, i32
  }
  func.func @transform_1(%arg0: i32, %arg1: i32) -> (i32, i32) {
    %c1_i32 = arith.constant 1 : i32
    %0 = arith.muli %arg0, %c1_i32 : i32
    %1 = arith.addi %0, %arg1 : i32
    %c0_i32 = arith.constant 0 : i32
    %2 = arith.minsi %1, %c0_i32 : i32
    %c0_i32_0 = arith.constant 0 : i32
    %c0_i32_1 = arith.constant 0 : i32
    return %2, %c0_i32_0 : i32, i32
  }
  func.func @transform_2(%arg0: i32, %arg1: i32) -> (i32, i32) {
    %c0_i32 = arith.constant 0 : i32
    %c0_i32_0 = arith.constant 0 : i32
    return %arg0, %c0_i32 : i32, i32
  }
}

</mosaic_0001>

<llo_original>
// kernel: tpu_custom_call.1
$region0: #{tpu_custom_call.1}
  #allocation0 [shape = 'u32[]', space=smem, size = 0x4, offset = 0x4, fixed_abs, tag = 'smem constant byte address 0x4 - core index']
  #allocation1 [shape = 'u32[72,128]{1,0:T(1,128)}', space=vmem, size = 0x9000, scoped, tag = 'internal scratch']
  #allocation2 [shape = 's32[8,32]{1,0:T(8,128)}', space=vmem, size = 0x1000, scoped, tag = 'scratch operand']
  %s0 = inlined_call_operand.vmem [shape: f32[8,32], index: 0, kind: input, shape index: {}]
  %s1 = inlined_call_operand.vmem [shape: s32[8,1], index: 1, kind: input, shape index: {}]
  %s2 = inlined_call_operand.hbm [shape: f32[16,128], index: 2, kind: output, shape index: {}]
  %s3 = sld [smem:[#allocation0]]
  $region45: #{tpu_custom_call.1} parent=0
    _
  %s5 = ssub.s32 1, %s3
  %s6 = scalar_select 0, %s5, %s3
  $region1: #{tpu_custom_call.1} parent=0
    #allocation3 [shape = 'u8[8192]{0}', space=vmem, size = 0x2000, scoped, tag = 'output window, operand 0']
    #allocation4 [shape = 's32[2]{0}', space=sflag, size = 0x8, scoped, tag = 'scoped memory for tpu_custom_call.1']
    %7 = vsyncpa [#allocation4], 0
    %s8 = scalar_lea.sflag [#allocation4], 1
    %9 = vsyncpa %s8, 0
    loop: start=0, step=1, limit=4
    $region2: #{tpu_custom_call.1} parent=1 // loop_pre_header
      _
    $region3: #{tpu_custom_call.1} parent=1 // loop_header
      %s11 = sphi 0, %s15
      %p12 = scmp.ge.s32.totalorder %s11, 4
      %s18 = sphi 0, %s30
      %s19 = sphi 0, %s26
      %s20 = sphi 0, %s18
      %s21 = sphi 0, %s19
      %s22 = sphi 0, %s20
      %s23 = sphi 0, %s21
      %s39 = sphi 0, %s41
      %s42 = sphi 0, %s39
      %s43 = sphi 0, %s42
      %s59 = sphi 0, %s43
      %s71 = sphi 0, %s73
      %s74 = sphi 0, %s71
      %s75 = sphi 0, %s74
      %s91 = sphi 0, %s75
      %s97 = sphi 0, %s99
      %s100 = sphi 0, %s97
      %s101 = sphi 0, %s100
      %s117 = sphi 0, %s101
    $region4: #{tpu_custom_call.1} parent=1 // loop_header_branch
      %14 = sbr.rel (%p12) target = $region8
    $region5: #{tpu_custom_call.1} parent=1 // loop_body
      %s16 = ssub.s32 %s11, 1
      %s17 = ssub.s32 %s11, 2
      %s24 = sadd.s32 1, %s19
      %p25 = scmp.ge.s32.totalorder %s24, 1
      %s26 = scalar_select %p25, 0, %s24
      %s27 = sadd.s32 1, %s18
      %s28 = scalar_select %p25, %s27, %s18
      %p29 = scmp.ge.s32.totalorder %s28, 2
      %s30 = scalar_select %p29, 0, %s28
      %s31 = sadd.s32 %s18, %s19
      %p32 = scmp.lt.s32.totalorder %s31, 0
      %s33 = scalar_select %p32, %s31, 0
      %s34 = sadd.s32 %s30, %s26
      %p35 = scmp.lt.s32.totalorder %s34, 0
      %s36 = scalar_select %p35, %s34, 0
      %s37 = ssub.s32 %s33, %s36
      %p38 = scmp.eq.s32.totalorder %s37, 0
      %s40 = sadd.s32 %s39, 1
      %s41 = scalar_select %p38, %s39, %s40
      %p44 = pneg %p38
      %p45 = scmp.eq.s32.totalorder %s11, 1
      %p46 = por %p44, %p45
      %p47 = scmp.ne.s32.totalorder %s39, %s42
      %p48 = scmp.eq.s32.totalorder %s11, 0
      %p49 = por %p47, %p48
      %p50 = scmp.ne.s32.totalorder %s39, %s42
      %p51 = scmp.eq.s32.totalorder %s16, 1
      %p52 = por %p50, %p51
      %p53 = scmp.ne.s32.totalorder %s42, %s43
      %p54 = scmp.eq.s32.totalorder %s16, 0
      %p55 = por %p53, %p54
      %p56 = scmp.ne.s32.totalorder %s42, %s43
      %p57 = scmp.eq.s32.totalorder %s17, 1
      %p58 = por %p56, %p57
      %p60 = scmp.ne.s32.totalorder %s43, %s59
      %p61 = scmp.eq.s32.totalorder %s17, 0
      %p62 = por %p60, %p61
      %s63 = sadd.s32 %s18, %s19
      %p64 = scmp.lt.s32.totalorder %s63, 0
      %s65 = scalar_select %p64, %s63, 0
      %s66 = sadd.s32 %s30, %s26
      %p67 = scmp.lt.s32.totalorder %s66, 0
      %s68 = scalar_select %p67, %s66, 0
      %s69 = ssub.s32 %s65, %s68
      %p70 = scmp.eq.s32.totalorder %s69, 0
      %s72 = sadd.s32 %s71, 1
      %s73 = scalar_select %p70, %s71, %s72
      %p76 = pneg %p70
      %p77 = scmp.eq.s32.totalorder %s11, 1
      %p78 = por %p76, %p77
      %p79 = scmp.ne.s32.totalorder %s71, %s74
      %p80 = scmp.eq.s32.totalorder %s11, 0
      %p81 = por %p79, %p80
      %p82 = scmp.ne.s32.totalorder %s71, %s74
      %p83 = scmp.eq.s32.totalorder %s16, 1
      %p84 = por %p82, %p83
      %p85 = scmp.ne.s32.totalorder %s74, %s75
      %p86 = scmp.eq.s32.totalorder %s16, 0
      %p87 = por %p85, %p86
      %p88 = scmp.ne.s32.totalorder %s74, %s75
      %p89 = scmp.eq.s32.totalorder %s17, 1
      %p90 = por %p88, %p89
      %p92 = scmp.ne.s32.totalorder %s75, %s91
      %p93 = scmp.eq.s32.totalorder %s17, 0
      %p94 = por %p92, %p93
      %s95 = ssub.s32 %s18, %s30
      %p96 = scmp.eq.s32.totalorder %s95, 0
      %s98 = sadd.s32 %s97, 1
      %s99 = scalar_select %p96, %s97, %s98
      %p102 = pneg %p96
      %p103 = scmp.eq.s32.totalorder %s11, 1
      %p104 = por %p102, %p103
      %p105 = scmp.ne.s32.totalorder %s97, %s100
      %p106 = scmp.eq.s32.totalorder %s11, 0
      %p107 = por %p105, %p106
      %p108 = scmp.ne.s32.totalorder %s97, %s100
      %p109 = scmp.eq.s32.totalorder %s16, 1
      %p110 = por %p108, %p109
      %p111 = scmp.ne.s32.totalorder %s100, %s101
      %p112 = scmp.eq.s32.totalorder %s16, 0
      %p113 = por %p111, %p112
      %p114 = scmp.ne.s32.totalorder %s100, %s101
      %p115 = scmp.eq.s32.totalorder %s17, 1
      %p116 = por %p114, %p115
      %p118 = scmp.ne.s32.totalorder %s101, %s117
      %p119 = scmp.eq.s32.totalorder %s17, 0
      %p120 = por %p118, %p119
      %p121 = scmp.le.s32.totalorder 1, %s11
      %p122 = scmp.lt.s32.totalorder %s11, 3
      %p123 = pnand %p121, %p122
      %p124 = pneg %p123
      // Predicated region
      $region9: #{tpu_custom_call.1} parent=5 // pred_check
        _
      $region10: #{tpu_custom_call.1} parent=5 // pred_check_branch
        %126 = sbr.rel (%p123) target = $region12
      $region11: #{tpu_custom_call.1} parent=5 // pred_region
        %s127 = ssub.s32 %s11, 1
      $region12: #{tpu_custom_call.1} parent=5 // pred_fallthru
        _
      %p128 = scmp.lt.s32.totalorder %s11, 2
      // Predicated region
      $region13: #{tpu_custom_call.1} parent=5 // pred_check
        %p129 = pneg %p128
      $region14: #{tpu_custom_call.1} parent=5 // pred_check_branch
        %131 = sbr.rel (%p129) target = $region16
      $region15: #{tpu_custom_call.1} parent=5 // pred_region
        // Predicated region
        $region17: #{tpu_custom_call.1} parent=15 // pred_check
          %p132 = pneg %p49
        $region18: #{tpu_custom_call.1} parent=15 // pred_check_branch
          %134 = sbr.rel (%p132) target = $region20
        $region19: #{tpu_custom_call.1} parent=15 // pred_region
          %s135 = sadd.s32 %s18, %s19
          %p136 = scmp.lt.s32.totalorder %s135, 0
          %s137 = scalar_select %p136, %s135, 0
          %p138 = scmp.lt.s32.totalorder %s137, 0
          %s139 = scalar_select %p138, %s137, 0
          %s140 = smul.addr %s139, 8
          %s141 = scalar_lea.vmem %s0, %s140
          %s142 = sadd.s32 %s18, %s19
          %p143 = scmp.lt.s32.totalorder %s142, 0
          %s144 = scalar_select %p143, %s142, 0
        $region20: #{tpu_custom_call.1} parent=15 // pred_fallthru
          _
        // Predicated region
        $region21: #{tpu_custom_call.1} parent=15 // pred_check
          %p145 = pneg %p81
        $region22: #{tpu_custom_call.1} parent=15 // pred_check_branch
          %147 = sbr.rel (%p145) target = $region24
        $region23: #{tpu_custom_call.1} parent=15 // pred_region
          %s148 = sadd.s32 %s18, %s19
          %p149 = scmp.lt.s32.totalorder %s148, 0
          %s150 = scalar_select %p149, %s148, 0
          %p151 = scmp.lt.s32.totalorder %s150, 0
          %s152 = scalar_select %p151, %s150, 0
          %s153 = smul.addr %s152, 8
          %s154 = scalar_lea.vmem %s1, %s153
          %s155 = sadd.s32 %s18, %s19
          %p156 = scmp.lt.s32.totalorder %s155, 0
          %s157 = scalar_select %p156, %s155, 0
        $region24: #{tpu_custom_call.1} parent=15 // pred_fallthru
          _
      $region16: #{tpu_custom_call.1} parent=5 // pred_fallthru
        _
      %p158 = scmp.le.s32.totalorder 1, %s11
      %p159 = scmp.lt.s32.totalorder %s11, 3
      %p160 = pnand %p158, %p159
      %p161 = pneg %p160
      // Predicated region
      $region25: #{tpu_custom_call.1} parent=5 // pred_check
        _
      $region26: #{tpu_custom_call.1} parent=5 // pred_check_branch
        %163 = sbr.rel (%p160) target = $region28
      $region27: #{tpu_custom_call.1} parent=5 // pred_region
        %s164 = ssub.s32 %s11, 1
        %s165 = sadd.s32 %s20, %s21
        %p166 = scmp.lt.s32.totalorder %s165, 0
        %s167 = scalar_select %p166, %s165, 0
        %p168 = scmp.lt.s32.totalorder %s167, 0
        %s169 = scalar_select %p168, %s167, 0
        %s170 = smul.addr %s169, 8
        %s171 = scalar_lea.vmem %s0, %s170
        %p172 = pneg %p55
        %p173 = pneg %p52
        %s174 = sadd.s32 %s20, %s21
        %p175 = scmp.lt.s32.totalorder %s174, 0
        %s176 = scalar_select %p175, %s174, 0
        %p177 = scmp.lt.s32.totalorder %s176, 0
        %s178 = scalar_select %p177, %s176, 0
        %s179 = smul.addr %s178, 8
        %s180 = scalar_lea.vmem %s1, %s179
        %p181 = pneg %p87
        %p182 = pneg %p84
        %p183 = pneg %p113
        %p184 = pneg %p110
        %s185 = sand.u32 %s100, 1
        %s186 = scalar_lea.sflag [#allocation4], %s185
        %s187 = sand.u32 %s100, 1
        %s188 = smul.addr %s187, 8
        %s189 = scalar_lea.vmem [#allocation3], %s188
        %s190 = sadd.s32 %s20, %s21
        %p191 = scmp.lt.s32.totalorder %s190, 0
        %s192 = scalar_select %p191, %s190, 0
        %p193 = scmp.lt.s32.totalorder %s192, 0
        %s194 = scalar_select %p193, %s192, 0
        %s195 = smul.addr %s194, 8
        %s196 = scalar_lea.vmem %s0, %s195
        %s197 = sadd.s32 %s20, %s21
        %p198 = scmp.lt.s32.totalorder %s197, 0
        %s199 = scalar_select %p198, %s197, 0
        %s200 = sadd.s32 %s20, %s21
        %p201 = scmp.lt.s32.totalorder %s200, 0
        %s202 = scalar_select %p201, %s200, 0
        %p203 = scmp.lt.s32.totalorder %s202, 0
        %s204 = scalar_select %p203, %s202, 0
        %s205 = smul.addr %s204, 8
        %s206 = scalar_lea.vmem %s1, %s205
        %s207 = sadd.s32 %s20, %s21
        %p208 = scmp.lt.s32.totalorder %s207, 0
        %s209 = scalar_select %p208, %s207, 0
        %p210 = scmp.eq.s32.totalorder %s21, 0
        // Predicated region
        $region29: #{tpu_custom_call.1} parent=27 // pred_check
          %p211 = pneg %p210
        $region30: #{tpu_custom_call.1} parent=27 // pred_check_branch
          %213 = sbr.rel (%p211) target = $region32
        $region31: #{tpu_custom_call.1} parent=27 // pred_region
          %214 = vst [vmem:[%s189] sm:$0xff] 0.0
          %v215 = vlaneseq
          %v216 = vand.u32 %v215, 127
          %vm217 = vcmask 261120
          %218 = vst.msk [vmem:[#allocation2] sm:$0xff] %vm217, %v216
        $region32: #{tpu_custom_call.1} parent=27 // pred_fallthru
          _
        %v219 = vld [vmem:[%s196] sm:$0xff]
        %v220 = vld [vmem:[%s206] sm:$0xff]
        %vm221 = vcmask 261120
        %v222 = vsel %vm221, %v219, -inf
        %223 = vmax.xlane.f32.xlu0 %v222
        %v224 = vpop.xlane.xlu0 %223
        %v225 = vsub.f32 %v219, %v224
        %v226 = vmul.f32 %v225, 1.442695
        %v227 = vpow.pop %v226
        %v228 = vsel %vm221, %v227, 0.0
        %229 = vadd.xlane.f32.xlu0 %v228
        %v230 = vpop.xlane.xlu0 %229
        %v231 = vlog2.pop %v230
        %v232 = vmul.f32 %v231, 0.6931472
        %v233 = vld [vmem:[#allocation2] sm:$0xff]
        %234 = vset.pattern.permute.xlu0 0
        %235 = vperm.xlu0 %234, %v220
        %v236 = vpop.permute.xlu0 %235
        %vm237 = vcmp.eq.s32.totalorder %v233, %v236
        %v238 = vsel %vm237, %v225, 0.0
        %v239 = vsel %vm221, %v238, 0.0
        %240 = vadd.xlane.f32.xlu0 %v239
        %v241 = vpop.xlane.xlu0 %240
        %v242 = vsub.f32 %v232, %v241
        %v243 = vsub.f32 0.0, %v242
        %v244 = vmul.f32 %v243, 1.442695
        %v245 = vpow.pop %v244
        %v246 = vsub.f32 1.0, %v245
        %v247 = vmul.f32 %v246, %v246
        %v248 = vmul.f32 %v247, %v242
        %s249 = sadd.s32 %s20, %s21
        %s250 = smul.u32 %s249, 8
        %v251 = vlaneseq
        %v252 = vshrl.u32 %v251, 7
        %v253 = vstv %s250
        %v254 = vadd.s32 %v253, %v252
        %vm255 = vcmp.lt.s32.totalorder %v254, 8
        %v256 = vsel %vm255, %v248, 0.0
        %v257 = vld [vmem:[%s189] sm:$0xff]
        %vm258 = vcmask 7168
        %v259 = vsel %vm258, %v256, 0.0
        %260 = vadd.xlane.f32.xlu0 %v259
        %v261 = vpop.xlane.xlu0 %260
        %v262 = vrot.slane %v261, 4
        %v263 = vadd.f32 %v261, %v262
        %v264 = vrot.slane %v263, 2
        %v265 = vadd.f32 %v263, %v264
        %v266 = vrot.slane %v265, 1
        %v267 = vadd.f32 %v265, %v266
        %s268 = vtos %v267
        %v269 = vstv %s268
        %v270 = vadd.f32 %v257, %v269
        %271 = vst [vmem:[%s189] sm:$0xff] %v270
        %s272 = sand.u32 %s100, 1
        %s273 = scalar_lea.sflag [#allocation4], %s272
        %s274 = sand.u32 %s100, 1
        %s275 = smul.addr %s274, 8
        %s276 = scalar_lea.vmem [#allocation3], %s275
        // Predicated region
        $region33: #{tpu_custom_call.1} parent=27 // pred_check
          %p277 = pneg %p110
        $region34: #{tpu_custom_call.1} parent=27 // pred_check_branch
          %279 = sbr.rel (%p277) target = $region36
        $region35: #{tpu_custom_call.1} parent=27 // pred_region
          %281 = vsyncadd %s273, 0
          %s282 = smul.addr %s20, 8
          %s283 = scalar_lea.hbm %s2, %s282
          %s285 = sshll.u32 %s276, 4
          %s286 = int_to_ptr.vmem [resolvable:$true] %s285
          %s287 = sshll.u32 %s283, 4
          %s288 = int_to_ptr.hbm [resolvable:$true] %s287
          %290 = dma.vmem_to_hbm [thread:$0]  %s286, 128, %s288, %s273
        $region36: #{tpu_custom_call.1} parent=27 // pred_fallthru
          _
      $region28: #{tpu_custom_call.1} parent=5 // pred_fallthru
        _
      %p291 = scmp.le.s32.totalorder 2, %s11
      // Predicated region
      $region37: #{tpu_custom_call.1} parent=5 // pred_check
        %p292 = pneg %p291
      $region38: #{tpu_custom_call.1} parent=5 // pred_check_branch
        %294 = sbr.rel (%p292) target = $region40
      $region39: #{tpu_custom_call.1} parent=5 // pred_region
        %s295 = ssub.s32 %s11, 2
        // Predicated region
        $region41: #{tpu_custom_call.1} parent=39 // pred_check
          %p296 = pneg %p116
        $region42: #{tpu_custom_call.1} parent=39 // pred_check_branch
          %298 = sbr.rel (%p296) target = $region44
        $region43: #{tpu_custom_call.1} parent=39 // pred_region
          %s299 = sand.u32 %s101, 1
          %s300 = scalar_lea.sflag [#allocation4], %s299
          %s301 = sand.u32 %s101, 1
          %s302 = smul.addr %s301, 8
          %s303 = scalar_lea.vmem [#allocation3], %s302
          %305 = dma.done %s300, 128
        $region44: #{tpu_custom_call.1} parent=39 // pred_fallthru
          _
      $region40: #{tpu_custom_call.1} parent=5 // pred_fallthru
        _
    $region6: #{tpu_custom_call.1} parent=1 // loop_footer
      %s15 = sadd.s32 1, %s11
    $region7: #{tpu_custom_call.1} parent=1 // loop_footer_branch
      %10 = sbr.rel target = $region3
    $region8: #{tpu_custom_call.1} parent=1 // loop_exit
      _
    %306 = vsyncpa [#allocation4], 1
    %s307 = scalar_lea.sflag [#allocation4], 1
    %308 = vsyncpa %s307, 1

</llo_original>
